<compile_context>
chip_gen: v7x
topology: tpu7x:2x2x1
jax: 0.10.0
libtpu: 0.0.40
codegen_flags: <defaults>
</compile_context>

<pallas_src>
import jax
import jax.numpy as jnp
from jax.experimental import pallas as pl
from jax.experimental.pallas import tpu as pltpu

HIDDEN = 128  # fc1/fc2/fc3 width; also the padded fc4 output width


def _disc_kernel(s_ref, a_ref, w1_ref, b1_ref, w2_ref, b2_ref,
                 w3_ref, b3_ref, w4_ref, b4_ref, out_ref, sa_ref):
    bf16 = jnp.bfloat16
    sd = s_ref.shape[1]

    # Assemble [state | action] in a VMEM scratch (masked lane stores) so fc1 is
    # a single MXU pass over K = state_dim + action_dim.
    sa_ref[:, :sd] = s_ref[...]
    sa_ref[:, sd:] = a_ref[...]

    # fc1 + relu (bf16 matmul, f32 accumulate / elementwise)
    h = jnp.dot(sa_ref[...].astype(bf16), w1_ref[...],
                preferred_element_type=jnp.float32)
    h = jnp.maximum(h + b1_ref[...], 0.0)

    # fc2 + relu
    h = jnp.dot(h.astype(bf16), w2_ref[...], preferred_element_type=jnp.float32)
    h = jnp.maximum(h + b2_ref[...], 0.0)

    # fc3 + relu
    h = jnp.dot(h.astype(bf16), w3_ref[...], preferred_element_type=jnp.float32)
    h = jnp.maximum(h + b3_ref[...], 0.0)

    # fc4 (w4 zero-padded to 128 output cols keeps the matmul lane-dense)
    d = jnp.dot(h.astype(bf16), w4_ref[...], preferred_element_type=jnp.float32)
    d = d + b4_ref[...]                      # only column 0 is real; rest is pad

    # Pack the per-row scalar result lane-dense: XLU transpose, keep row 0 only.
    row = d.T[0:1, :]                        # (1, TM)
    out_ref[...] = jnp.clip(jax.nn.sigmoid(row), 0.1, 0.9)


def discriminator_forward(state, action, params, tm=None):
    """state: (B, state_dim) f32, action: (B, action_dim) f32 -> (B, 1) f32."""
    B, state_dim = state.shape
    action_dim = action.shape[1]
    in_dim = state_dim + action_dim
    (w1, b1, w2, b2, w3, b3, w4, b4) = params

    # Batch tile: whole (8-padded) batch in one step when small; otherwise up to
    # 1024 rows/step with at least 2 grid steps (so v7x's 2 TCs both get work).
    if tm is None:
        if B < 256:
            tm = max(8, pl.cdiv(B, 8) * 8)
        else:
            tm = min(1024, pl.cdiv(pl.cdiv(B, 2), 128) * 128)

    steps = pl.cdiv(B, tm)
    Bp = steps * tm
    if Bp != B:
        pad = Bp - B
        state = jnp.pad(state, ((0, pad), (0, 0)))
        action = jnp.pad(action, ((0, pad), (0, 0)))

    vmem = pltpu.MemorySpace.VMEM

    def resident(shape):  # weights/biases: same block every grid step
        return pl.BlockSpec(shape, lambda i: (0, 0), memory_space=vmem)

    out = pl.pallas_call(
        _disc_kernel,
        out_shape=jax.ShapeDtypeStruct((steps, tm), jnp.float32),
        grid=(steps,),
        in_specs=[
            pl.BlockSpec((tm, state_dim), lambda i: (i, 0), memory_space=vmem),
            pl.BlockSpec((tm, action_dim), lambda i: (i, 0), memory_space=vmem),
            resident((in_dim, HIDDEN)),    # w1 (bf16)
            resident((1, HIDDEN)),         # b1 (f32)
            resident((HIDDEN, HIDDEN)),    # w2 (bf16)
            resident((1, HIDDEN)),         # b2
            resident((HIDDEN, HIDDEN)),    # w3 (bf16)
            resident((1, HIDDEN)),         # b3
            resident((HIDDEN, HIDDEN)),    # w4 padded to 128 cols (bf16)
            resident((1, HIDDEN)),         # b4 padded to 128 cols (f32)
        ],
        out_specs=pl.BlockSpec((1, tm), lambda i: (i, 0), memory_space=vmem),
        scratch_shapes=[pltpu.VMEM((tm, in_dim), jnp.float32)],
        compiler_params=pltpu.CompilerParams(
            dimension_semantics=("parallel",)),
    )(state, action, w1, b1, w2, b2, w3, b3, w4, b4)

    # (steps, tm) packed scalars -> (B, 1); only B*4 bytes are touched here.
    return out.reshape(-1)[:B][:, None]


def init_params(key, state_dim, action_dim):
    """Deterministic init matching nn.Linear defaults (uniform +/- 1/sqrt(fan_in)).
    Weights stored as (in, out); fc4 weight/bias zero-padded to 128 output cols.
    Weights bf16, biases f32."""
    def linear(key, fan_in, fan_out):
        kw, kb = jax.random.split(key)
        bound = 1.0 / jnp.sqrt(fan_in)
        w = jax.random.uniform(kw, (fan_in, fan_out), jnp.float32, -bound, bound)
        b = jax.random.uniform(kb, (1, fan_out), jnp.float32, -bound, bound)
        return w, b

    k1, k2, k3, k4 = jax.random.split(key, 4)
    in_dim = state_dim + action_dim
    w1, b1 = linear(k1, in_dim, HIDDEN)
    w2, b2 = linear(k2, HIDDEN, HIDDEN)
    w3, b3 = linear(k3, HIDDEN, HIDDEN)
    w4, b4 = linear(k4, HIDDEN, 1)

    w4p = jnp.pad(w4, ((0, 0), (0, HIDDEN - 1)))   # (128, 128), cols 1.. are 0
    b4p = jnp.pad(b4, ((0, 0), (0, HIDDEN - 1)))   # (1, 128)

    bf16 = jnp.bfloat16
    return (w1.astype(bf16), b1,
            w2.astype(bf16), b2,
            w3.astype(bf16), b3,
            w4p.astype(bf16), b4p)


def _reference(state, action, params):
    """Plain-JAX reference mirroring the kernel's bf16-matmul / f32-accumulate math."""
    (w1, b1, w2, b2, w3, b3, w4, b4) = params

    def dot(x, w):
        return jnp.dot(x.astype(jnp.bfloat16), w,
                       preferred_element_type=jnp.float32)

    sa = jnp.concatenate([state, action], axis=1)
    h = jnp.maximum(dot(sa, w1) + b1, 0.0)
    h = jnp.maximum(dot(h, w2) + b2, 0.0)
    h = jnp.maximum(dot(h, w3) + b3, 0.0)
    d = jax.nn.sigmoid(dot(h, w4)[:, :1] + b4[:, :1])
    return jnp.clip(d, 0.1, 0.9)


if __name__ == "__main__":
    key = jax.random.PRNGKey(0)
    k_p, k_s, k_a = jax.random.split(key, 3)

    STATE_DIM, ACTION_DIM, BATCH = 16, 16, 8

    params = init_params(k_p, STATE_DIM, ACTION_DIM)
    state = jax.random.normal(k_s, (BATCH, STATE_DIM), jnp.float32)
    action = jax.random.normal(k_a, (BATCH, ACTION_DIM), jnp.float32)

    out = discriminator_forward(state, action, params)
    out = jax.block_until_ready(out)

    ref = _reference(state, action, params)
    assert out.shape == (BATCH, 1), out.shape
    assert jnp.allclose(out, ref, atol=1e-3, rtol=1e-3), (out, ref)
    assert bool(jnp.all((out >= 0.1) & (out <= 0.9)))

    print("KERNEL_OK")
</pallas_src>

<mosaic_0001>
module attributes {stable_mosaic.version = 11 : i64} {
  func.func @_disc_kernel(%arg0: i32, %arg1: memref<8x16xf32, #tpu.memory_space<vmem>>, %arg2: memref<8x16xf32, #tpu.memory_space<vmem>>, %arg3: memref<32x128xbf16, #tpu.memory_space<vmem>>, %arg4: memref<1x128xf32, #tpu.memory_space<vmem>>, %arg5: memref<128x128xbf16, #tpu.memory_space<vmem>>, %arg6: memref<1x128xf32, #tpu.memory_space<vmem>>, %arg7: memref<128x128xbf16, #tpu.memory_space<vmem>>, %arg8: memref<1x128xf32, #tpu.memory_space<vmem>>, %arg9: memref<128x128xbf16, #tpu.memory_space<vmem>>, %arg10: memref<1x128xf32, #tpu.memory_space<vmem>>, %arg11: memref<1x8xf32, #tpu.memory_space<vmem>>, %arg12: memref<8x32xf32, #tpu.memory_space<vmem>>) attributes {dimension_semantics = [#tpu.dimension_semantics<parallel>], iteration_bounds = array<i64: 1>, scalar_prefetch = 0 : i64, scratch_operands = 1 : i64, tpu.core_type = #tpu.core_type<tc>, window_params = [{transform_indices = @transform_0, window_bounds = array<i64: 8, 16>}, {transform_indices = @transform_1, window_bounds = array<i64: 8, 16>}, {pipeline_mode = #tpu.pipeline_mode<synchronous>, transform_indices = @transform_2, window_bounds = array<i64: 32, 128>}, {pipeline_mode = #tpu.pipeline_mode<synchronous>, transform_indices = @transform_3, window_bounds = array<i64: 1, 128>}, {pipeline_mode = #tpu.pipeline_mode<synchronous>, transform_indices = @transform_4, window_bounds = array<i64: 128, 128>}, {pipeline_mode = #tpu.pipeline_mode<synchronous>, transform_indices = @transform_5, window_bounds = array<i64: 1, 128>}, {pipeline_mode = #tpu.pipeline_mode<synchronous>, transform_indices = @transform_6, window_bounds = array<i64: 128, 128>}, {pipeline_mode = #tpu.pipeline_mode<synchronous>, transform_indices = @transform_7, window_bounds = array<i64: 1, 128>}, {pipeline_mode = #tpu.pipeline_mode<synchronous>, transform_indices = @transform_8, window_bounds = array<i64: 128, 128>}, {pipeline_mode = #tpu.pipeline_mode<synchronous>, transform_indices = @transform_9, window_bounds = array<i64: 1, 128>}, {transform_indices = @transform_10, window_bounds = array<i64: 1, 8>}]} {
    %c0 = arith.constant 0 : index
    %c0_0 = arith.constant 0 : index
    %0 = vector.load %arg1[%c0, %c0_0] : memref<8x16xf32, #tpu.memory_space<vmem>>, vector<8x16xf32>
    %c0_1 = arith.constant 0 : index
    %c0_2 = arith.constant 0 : index
    %1 = vector.load %arg12[%c0_1, %c0_2] : memref<8x32xf32, #tpu.memory_space<vmem>>, vector<8x16xf32>
    tpu.vector_store %arg12[%c0_1, %c0_2], %0 {strides = array<i32>} : memref<8x32xf32, #tpu.memory_space<vmem>>, vector<8x16xf32>,
    %c0_3 = arith.constant 0 : index
    %c0_4 = arith.constant 0 : index
    %2 = vector.load %arg2[%c0_3, %c0_4] : memref<8x16xf32, #tpu.memory_space<vmem>>, vector<8x16xf32>
    %c0_5 = arith.constant 0 : index
    %c16 = arith.constant 16 : index
    %3 = vector.load %arg12[%c0_5, %c16] : memref<8x32xf32, #tpu.memory_space<vmem>>, vector<8x16xf32>
    tpu.vector_store %arg12[%c0_5, %c16], %2 {strides = array<i32>} : memref<8x32xf32, #tpu.memory_space<vmem>>, vector<8x16xf32>,
    %c0_6 = arith.constant 0 : index
    %c0_7 = arith.constant 0 : index
    %4 = vector.load %arg12[%c0_6, %c0_7] : memref<8x32xf32, #tpu.memory_space<vmem>>, vector<8x32xf32>
    %5 = arith.truncf %4 : vector<8x32xf32> to vector<8x32xbf16>
    %c0_8 = arith.constant 0 : index
    %c0_9 = arith.constant 0 : index
    %6 = vector.load %arg3[%c0_8, %c0_9] : memref<32x128xbf16, #tpu.memory_space<vmem>>, vector<32x128xbf16>
    %cst = arith.constant dense<0.000000e+00> : vector<8x128xf32>
    %7 = tpu.matmul %5, %6, %cst {dimension_numbers = #tpu.dot_dimension_numbers<[1], [0], [0], [1], [0, 0, 1, 1], [], []>} : vector<8x32xbf16>, vector<32x128xbf16>, vector<8x128xf32> -> vector<8x128xf32>
    %c0_10 = arith.constant 0 : index
    %c0_11 = arith.constant 0 : index
    %8 = vector.load %arg4[%c0_10, %c0_11] : memref<1x128xf32, #tpu.memory_space<vmem>>, vector<1x128xf32>
    %9 = vector.broadcast %8 : vector<1x128xf32> to vector<8x128xf32>
    %10 = arith.addf %7, %9 : vector<8x128xf32>
    %cst_12 = arith.constant 0.000000e+00 : f32
    %11 = vector.broadcast %cst_12 : f32 to vector<8x128xf32>
    %12 = arith.maximumf %10, %11 : vector<8x128xf32>
    %13 = arith.truncf %12 : vector<8x128xf32> to vector<8x128xbf16>
    %c0_13 = arith.constant 0 : index
    %c0_14 = arith.constant 0 : index
    %14 = vector.load %arg5[%c0_13, %c0_14] : memref<128x128xbf16, #tpu.memory_space<vmem>>, vector<128x128xbf16>
    %cst_15 = arith.constant dense<0.000000e+00> : vector<8x128xf32>
    %15 = tpu.matmul %13, %14, %cst_15 {dimension_numbers = #tpu.dot_dimension_numbers<[1], [0], [0], [1], [0, 0, 1, 1], [], []>} : vector<8x128xbf16>, vector<128x128xbf16>, vector<8x128xf32> -> vector<8x128xf32>
    %c0_16 = arith.constant 0 : index
    %c0_17 = arith.constant 0 : index
    %16 = vector.load %arg6[%c0_16, %c0_17] : memref<1x128xf32, #tpu.memory_space<vmem>>, vector<1x128xf32>
    %17 = vector.broadcast %16 : vector<1x128xf32> to vector<8x128xf32>
    %18 = arith.addf %15, %17 : vector<8x128xf32>
    %cst_18 = arith.constant 0.000000e+00 : f32
    %19 = vector.broadcast %cst_18 : f32 to vector<8x128xf32>
    %20 = arith.maximumf %18, %19 : vector<8x128xf32>
    %21 = arith.truncf %20 : vector<8x128xf32> to vector<8x128xbf16>
    %c0_19 = arith.constant 0 : index
    %c0_20 = arith.constant 0 : index
    %22 = vector.load %arg7[%c0_19, %c0_20] : memref<128x128xbf16, #tpu.memory_space<vmem>>, vector<128x128xbf16>
    %cst_21 = arith.constant dense<0.000000e+00> : vector<8x128xf32>
    %23 = tpu.matmul %21, %22, %cst_21 {dimension_numbers = #tpu.dot_dimension_numbers<[1], [0], [0], [1], [0, 0, 1, 1], [], []>} : vector<8x128xbf16>, vector<128x128xbf16>, vector<8x128xf32> -> vector<8x128xf32>
    %c0_22 = arith.constant 0 : index
    %c0_23 = arith.constant 0 : index
    %24 = vector.load %arg8[%c0_22, %c0_23] : memref<1x128xf32, #tpu.memory_space<vmem>>, vector<1x128xf32>
    %25 = vector.broadcast %24 : vector<1x128xf32> to vector<8x128xf32>
    %26 = arith.addf %23, %25 : vector<8x128xf32>
    %cst_24 = arith.constant 0.000000e+00 : f32
    %27 = vector.broadcast %cst_24 : f32 to vector<8x128xf32>
    %28 = arith.maximumf %26, %27 : vector<8x128xf32>
    %29 = arith.truncf %28 : vector<8x128xf32> to vector<8x128xbf16>
    %c0_25 = arith.constant 0 : index
    %c0_26 = arith.constant 0 : index
    %30 = vector.load %arg9[%c0_25, %c0_26] : memref<128x128xbf16, #tpu.memory_space<vmem>>, vector<128x128xbf16>
    %cst_27 = arith.constant dense<0.000000e+00> : vector<8x128xf32>
    %31 = tpu.matmul %29, %30, %cst_27 {dimension_numbers = #tpu.dot_dimension_numbers<[1], [0], [0], [1], [0, 0, 1, 1], [], []>} : vector<8x128xbf16>, vector<128x128xbf16>, vector<8x128xf32> -> vector<8x128xf32>
    %c0_28 = arith.constant 0 : index
    %c0_29 = arith.constant 0 : index
    %32 = vector.load %arg10[%c0_28, %c0_29] : memref<1x128xf32, #tpu.memory_space<vmem>>, vector<1x128xf32>
    %33 = vector.broadcast %32 : vector<1x128xf32> to vector<8x128xf32>
    %34 = arith.addf %31, %33 : vector<8x128xf32>
    %35 = tpu.transpose %34, [1, 0] : vector<8x128xf32> -> vector<128x8xf32>
    %36 = vector.extract_strided_slice %35 {offsets = [0, 0], sizes = [1, 8], strides = [1, 1]} : vector<128x8xf32> to vector<1x8xf32>
    %37 = arith.negf %36 : vector<1x8xf32>
    %38 = math.exp %37 : vector<1x8xf32>
    %cst_30 = arith.constant 1.000000e+00 : f32
    %39 = vector.broadcast %cst_30 : f32 to vector<1x8xf32>
    %40 = arith.addf %39, %38 : vector<1x8xf32>
    %41 = arith.divf %39, %40 : vector<1x8xf32>
    %cst_31 = arith.constant 1.000000e-01 : f32
    %cst_32 = arith.constant 0.899999976 : f32
    %42 = vector.broadcast %cst_31 : f32 to vector<1x8xf32>
    %43 = arith.maximumf %42, %41 : vector<1x8xf32>
    %44 = vector.broadcast %cst_32 : f32 to vector<1x8xf32>
    %45 = arith.minimumf %44, %43 : vector<1x8xf32>
    %c0_33 = arith.constant 0 : index
    %c0_34 = arith.constant 0 : index
    %46 = vector.load %arg11[%c0_33, %c0_34] : memref<1x8xf32, #tpu.memory_space<vmem>>, vector<1x8xf32>
    tpu.vector_store %arg11[%c0_33, %c0_34], %45 {strides = array<i32>} : memref<1x8xf32, #tpu.memory_space<vmem>>, vector<1x8xf32>,
    return
  }
  func.func @transform_0(%arg0: i32) -> (i32, i32) {
    %c0_i32 = arith.constant 0 : i32
    %c0_i32_0 = arith.constant 0 : i32
    return %arg0, %c0_i32 : i32, i32
  }
  func.func @transform_1(%arg0: i32) -> (i32, i32) {
    %c0_i32 = arith.constant 0 : i32
    %c0_i32_0 = arith.constant 0 : i32
    return %arg0, %c0_i32 : i32, i32
  }
  func.func @transform_2(%arg0: i32) -> (i32, i32) {
    %c0_i32 = arith.constant 0 : i32
    %c0_i32_0 = arith.constant 0 : i32
    %c0_i32_1 = arith.constant 0 : i32
    return %c0_i32, %c0_i32_0 : i32, i32
  }
  func.func @transform_3(%arg0: i32) -> (i32, i32) {
    %c0_i32 = arith.constant 0 : i32
    %c0_i32_0 = arith.constant 0 : i32
    %c0_i32_1 = arith.constant 0 : i32
    return %c0_i32, %c0_i32_0 : i32, i32
  }
  func.func @transform_4(%arg0: i32) -> (i32, i32) {
    %c0_i32 = arith.constant 0 : i32
    %c0_i32_0 = arith.constant 0 : i32
    %c0_i32_1 = arith.constant 0 : i32
    return %c0_i32, %c0_i32_0 : i32, i32
  }
  func.func @transform_5(%arg0: i32) -> (i32, i32) {
    %c0_i32 = arith.constant 0 : i32
    %c0_i32_0 = arith.constant 0 : i32
    %c0_i32_1 = arith.constant 0 : i32
    return %c0_i32, %c0_i32_0 : i32, i32
  }
  func.func @transform_6(%arg0: i32) -> (i32, i32) {
    %c0_i32 = arith.constant 0 : i32
    %c0_i32_0 = arith.constant 0 : i32
    %c0_i32_1 = arith.constant 0 : i32
    return %c0_i32, %c0_i32_0 : i32, i32
  }
  func.func @transform_7(%arg0: i32) -> (i32, i32) {
    %c0_i32 = arith.constant 0 : i32
    %c0_i32_0 = arith.constant 0 : i32
    %c0_i32_1 = arith.constant 0 : i32
    return %c0_i32, %c0_i32_0 : i32, i32
  }
  func.func @transform_8(%arg0: i32) -> (i32, i32) {
    %c0_i32 = arith.constant 0 : i32
    %c0_i32_0 = arith.constant 0 : i32
    %c0_i32_1 = arith.constant 0 : i32
    return %c0_i32, %c0_i32_0 : i32, i32
  }
  func.func @transform_9(%arg0: i32) -> (i32, i32) {
    %c0_i32 = arith.constant 0 : i32
    %c0_i32_0 = arith.constant 0 : i32
    %c0_i32_1 = arith.constant 0 : i32
    return %c0_i32, %c0_i32_0 : i32, i32
  }
  func.func @transform_10(%arg0: i32) -> (i32, i32) {
    %c0_i32 = arith.constant 0 : i32
    %c0_i32_0 = arith.constant 0 : i32
    return %arg0, %c0_i32 : i32, i32
  }
}

</mosaic_0001>

<llo_original>
// kernel: tpu_custom_call.1
$region0: #{tpu_custom_call.1}
  #allocation0 [shape = 'u32[]', space=smem, size = 0x4, offset = 0x4, fixed_abs, tag = 'smem constant byte address 0x4 - core index']
  #allocation1 [shape = 'u32[144,128]{1,0:T(1,128)}', space=vmem, size = 0x12000, scoped, tag = 'internal scratch']
  #allocation2 [shape = 'f32[8,32]{1,0:T(8,128)}', space=vmem, size = 0x1000, scoped, tag = 'scratch operand']
  %s0 = inlined_call_operand.hbm [shape: f32[8,16], index: 0, kind: input, shape index: {}]
  %s1 = inlined_call_operand.hbm [shape: f32[8,16], index: 1, kind: input, shape index: {}]
  %s2 = inlined_call_operand.hbm [shape: bf16[32,128], index: 2, kind: input, shape index: {}]
  %s3 = inlined_call_operand.vmem [shape: f32[1,128], index: 3, kind: input, shape index: {}]
  %s4 = inlined_call_operand.hbm [shape: bf16[128,128], index: 4, kind: input, shape index: {}]
  %s5 = inlined_call_operand.vmem [shape: f32[1,128], index: 5, kind: input, shape index: {}]
  %s6 = inlined_call_operand.hbm [shape: bf16[128,128], index: 6, kind: input, shape index: {}]
  %s7 = inlined_call_operand.vmem [shape: f32[1,128], index: 7, kind: input, shape index: {}]
  %s8 = inlined_call_operand.hbm [shape: bf16[128,128], index: 8, kind: input, shape index: {}]
  %s9 = inlined_call_operand.vmem [shape: f32[1,128], index: 9, kind: input, shape index: {}]
  %s10 = inlined_call_operand.hbm [shape: f32[1,8], index: 10, kind: output, shape index: {}]
  %s11 = sld [smem:[#allocation0]]
  $region74: #{tpu_custom_call.1} parent=0
    _
  %s13 = ssub.s32 1, %s11
  %s14 = scalar_select 0, %s13, %s11
  $region1: #{tpu_custom_call.1} parent=0
    #allocation3 [shape = 'u8[4096]{0}', space=vmem, size = 0x1000, scoped, tag = 'input window, operand 0, single buffered']
    #allocation4 [shape = 's32[1]{0}', space=sflag, size = 0x4, scoped, tag = 'scoped memory for tpu_custom_call.1']
    #allocation5 [shape = 's32[1]{0}', space=sflag, size = 0x4, scoped, tag = 'scoped memory for tpu_custom_call.1']
    #allocation6 [shape = 'u8[4096]{0}', space=vmem, size = 0x1000, scoped, tag = 'input window, operand 1, single buffered']
    #allocation7 [shape = 's32[1]{0}', space=sflag, size = 0x4, scoped, tag = 'scoped memory for tpu_custom_call.1']
    #allocation8 [shape = 'u8[8192]{0}', space=vmem, size = 0x2000, scoped, tag = 'input window, operand 2, single buffered']
    #allocation9 [shape = 'u8[32768]{0}', space=vmem, size = 0x8000, scoped, tag = 'input window, operand 4, single buffered']
    #allocation10 [shape = 's32[1]{0}', space=sflag, size = 0x4, scoped, tag = 'scoped memory for tpu_custom_call.1']
    #allocation11 [shape = 'u8[32768]{0}', space=vmem, size = 0x8000, scoped, tag = 'input window, operand 6, single buffered']
    #allocation12 [shape = 'u8[32768]{0}', space=vmem, size = 0x8000, scoped, tag = 'input window, operand 8, single buffered']
    #allocation13 [shape = 's32[1]{0}', space=sflag, size = 0x4, scoped, tag = 'scoped memory for tpu_custom_call.1']
    #allocation14 [shape = 'u8[512]{0}', space=vmem, size = 0x400, scoped, tag = 'output window, operand 0, single buffered']
    %15 = vsyncpa [#allocation4], 0
    %16 = vsyncpa [#allocation7], 0
    %17 = vsyncpa [#allocation10], 0
    %18 = vsyncpa [#allocation13], 0
    %19 = vsyncpa [#allocation5], 0
    // Predicated region
    $region2: #{tpu_custom_call.1} parent=1 // pred_check
      _
    $region3: #{tpu_custom_call.1} parent=1 // pred_check_branch
      %21 = sbr.rel (0) target = $region5
    $region4: #{tpu_custom_call.1} parent=1 // pred_region
      %s23 = ssub.s32 128, 128
      %24 = vsyncadd [#allocation4], %s23
      %s26 = sshll.u32 [#allocation3], 4
      %s27 = int_to_ptr.vmem [resolvable:$true] %s26
      %29 = dma.hbm_to_vmem [thread:$0]  %s0, 128, %s27, [#allocation4]
    $region5: #{tpu_custom_call.1} parent=1 // pred_fallthru
      _
    // Predicated region
    $region6: #{tpu_custom_call.1} parent=1 // pred_check
      _
    $region7: #{tpu_custom_call.1} parent=1 // pred_check_branch
      %31 = sbr.rel (0) target = $region9
    $region8: #{tpu_custom_call.1} parent=1 // pred_region
      %s33 = ssub.s32 128, 128
      %34 = vsyncadd [#allocation7], %s33
      %s36 = sshll.u32 [#allocation6], 4
      %s37 = int_to_ptr.vmem [resolvable:$true] %s36
      %39 = dma.hbm_to_vmem [thread:$0]  %s1, 128, %s37, [#allocation7]
    $region9: #{tpu_custom_call.1} parent=1 // pred_fallthru
      _
    // Predicated region
    $region10: #{tpu_custom_call.1} parent=1 // pred_check
      _
    $region11: #{tpu_custom_call.1} parent=1 // pred_check_branch
      %41 = sbr.rel (0) target = $region13
    $region12: #{tpu_custom_call.1} parent=1 // pred_region
      %s43 = ssub.s32 256, 256
      %44 = vsyncadd [#allocation7], %s43
      %s45 = sshll.u32 [#allocation8], 4
      %s46 = int_to_ptr.vmem [resolvable:$true] %s45
      %51 = dma.hbm_to_vmem [thread:$0]  %s2, 256, %s46, [#allocation7], 64, 64, 4
    $region13: #{tpu_custom_call.1} parent=1 // pred_fallthru
      _
    // Predicated region
    $region14: #{tpu_custom_call.1} parent=1 // pred_check
      _
    $region15: #{tpu_custom_call.1} parent=1 // pred_check_branch
      %53 = sbr.rel (0) target = $region17
    $region16: #{tpu_custom_call.1} parent=1 // pred_region
      _
    $region17: #{tpu_custom_call.1} parent=1 // pred_fallthru
      _
    // Predicated region
    $region18: #{tpu_custom_call.1} parent=1 // pred_check
      _
    $region19: #{tpu_custom_call.1} parent=1 // pred_check_branch
      %55 = sbr.rel (0) target = $region21
    $region20: #{tpu_custom_call.1} parent=1 // pred_region
      %s57 = ssub.s32 1024, 1024
      %58 = vsyncadd [#allocation10], %s57
      %s59 = sshll.u32 [#allocation9], 4
      %s60 = int_to_ptr.vmem [resolvable:$true] %s59
      %65 = dma.hbm_to_vmem [thread:$0]  %s4, 1024, %s60, [#allocation10], 64, 64, 4
    $region21: #{tpu_custom_call.1} parent=1 // pred_fallthru
      _
    // Predicated region
    $region22: #{tpu_custom_call.1} parent=1 // pred_check
      _
    $region23: #{tpu_custom_call.1} parent=1 // pred_check_branch
      %67 = sbr.rel (0) target = $region25
    $region24: #{tpu_custom_call.1} parent=1 // pred_region
      _
    $region25: #{tpu_custom_call.1} parent=1 // pred_fallthru
      _
    // Predicated region
    $region26: #{tpu_custom_call.1} parent=1 // pred_check
      _
    $region27: #{tpu_custom_call.1} parent=1 // pred_check_branch
      %69 = sbr.rel (0) target = $region29
    $region28: #{tpu_custom_call.1} parent=1 // pred_region
      %s71 = ssub.s32 1024, 1024
      %72 = vsyncadd [#allocation10], %s71
      %s73 = sshll.u32 [#allocation11], 4
      %s74 = int_to_ptr.vmem [resolvable:$true] %s73
      %79 = dma.hbm_to_vmem [thread:$0]  %s6, 1024, %s74, [#allocation10], 64, 64, 4
    $region29: #{tpu_custom_call.1} parent=1 // pred_fallthru
      _
    // Predicated region
    $region30: #{tpu_custom_call.1} parent=1 // pred_check
      _
    $region31: #{tpu_custom_call.1} parent=1 // pred_check_branch
      %81 = sbr.rel (0) target = $region33
    $region32: #{tpu_custom_call.1} parent=1 // pred_region
      _
    $region33: #{tpu_custom_call.1} parent=1 // pred_fallthru
      _
    // Predicated region
    $region34: #{tpu_custom_call.1} parent=1 // pred_check
      _
    $region35: #{tpu_custom_call.1} parent=1 // pred_check_branch
      %83 = sbr.rel (0) target = $region37
    $region36: #{tpu_custom_call.1} parent=1 // pred_region
      %s85 = ssub.s32 1024, 1024
      %86 = vsyncadd [#allocation13], %s85
      %s87 = sshll.u32 [#allocation12], 4
      %s88 = int_to_ptr.vmem [resolvable:$true] %s87
      %93 = dma.hbm_to_vmem [thread:$0]  %s8, 1024, %s88, [#allocation13], 64, 64, 4
    $region37: #{tpu_custom_call.1} parent=1 // pred_fallthru
      _
    // Predicated region
    $region38: #{tpu_custom_call.1} parent=1 // pred_check
      _
    $region39: #{tpu_custom_call.1} parent=1 // pred_check_branch
      %95 = sbr.rel (0) target = $region41
    $region40: #{tpu_custom_call.1} parent=1 // pred_region
      _
    $region41: #{tpu_custom_call.1} parent=1 // pred_fallthru
      _
    // Predicated region
    $region42: #{tpu_custom_call.1} parent=1 // pred_check
      _
    $region43: #{tpu_custom_call.1} parent=1 // pred_check_branch
      %97 = sbr.rel (0) target = $region45
    $region44: #{tpu_custom_call.1} parent=1 // pred_region
      %98 = dma.done [#allocation4], 128
    $region45: #{tpu_custom_call.1} parent=1 // pred_fallthru
      _
    // Predicated region
    $region46: #{tpu_custom_call.1} parent=1 // pred_check
      _
    $region47: #{tpu_custom_call.1} parent=1 // pred_check_branch
      %100 = sbr.rel (0) target = $region49
    $region48: #{tpu_custom_call.1} parent=1 // pred_region
      %101 = dma.done [#allocation7], 128
    $region49: #{tpu_custom_call.1} parent=1 // pred_fallthru
      _
    // Predicated region
    $region50: #{tpu_custom_call.1} parent=1 // pred_check
      _
    $region51: #{tpu_custom_call.1} parent=1 // pred_check_branch
      %103 = sbr.rel (0) target = $region53
    $region52: #{tpu_custom_call.1} parent=1 // pred_region
      %104 = dma.done [#allocation7], 256
    $region53: #{tpu_custom_call.1} parent=1 // pred_fallthru
      _
    // Predicated region
    $region54: #{tpu_custom_call.1} parent=1 // pred_check
      _
    $region55: #{tpu_custom_call.1} parent=1 // pred_check_branch
      %106 = sbr.rel (0) target = $region57
    $region56: #{tpu_custom_call.1} parent=1 // pred_region
      %107 = dma.done [#allocation10], 1024
    $region57: #{tpu_custom_call.1} parent=1 // pred_fallthru
      _
    // Predicated region
    $region58: #{tpu_custom_call.1} parent=1 // pred_check
      _
    $region59: #{tpu_custom_call.1} parent=1 // pred_check_branch
      %109 = sbr.rel (0) target = $region61
    $region60: #{tpu_custom_call.1} parent=1 // pred_region
      %110 = dma.done [#allocation10], 1024
    $region61: #{tpu_custom_call.1} parent=1 // pred_fallthru
      _
    // Predicated region
    $region62: #{tpu_custom_call.1} parent=1 // pred_check
      _
    $region63: #{tpu_custom_call.1} parent=1 // pred_check_branch
      %112 = sbr.rel (0) target = $region65
    $region64: #{tpu_custom_call.1} parent=1 // pred_region
      %113 = dma.done [#allocation13], 1024
    $region65: #{tpu_custom_call.1} parent=1 // pred_fallthru
      _
    %v115 = vld [vmem:[#allocation3] sm:$0xff]
    %vm116 = vcmask 130048
    %117 = vst.msk [vmem:[#allocation2] sm:$0xff] %vm116, %v115
    %v118 = vld [vmem:[#allocation6] sm:$0xff]
    %120 = vrot.lane.b32.xlu0 %v118, 16
    %v121 = vpop.permute.xlu0 %120
    %vm123 = vcmask 261248
    %124 = vst.msk [vmem:[#allocation2] sm:$0xff] %vm123, %v121
    %v125 = vld [vmem:[#allocation2] sm:$0xff]
    %v126 = vpack.c.bf16 %v125, %v125
    %v127 = vld [vmem:[#allocation8] sm:$0xf]
    %v128 = vld [vmem:[#allocation8 + $0x4] sm:$0xf]
    %v129 = vld [vmem:[#allocation8 + $0x8] sm:$0xf]
    %v130 = vld [vmem:[#allocation8 + $0xc] sm:$0xf]
    %v131 = vld [vmem:[%s3] sm:$0x1]
    %v133 = vlaneseq
    %v134 = vshrl.u32 %v133, 7
    %v135 = vsub.s32 0, %v134
    %v136 = vrot.slane %v131, %v135
    %v142 = vunpack.c.l.b16 %v127
    %v143 = vunpack.c.l.b16 %v128
    %v144 = vunpack.c.l.b16 %v129
    %v145 = vunpack.c.l.b16 %v130
    %v146 = vpack.c.b16 %v143, %v142
    %v147 = vpack.c.b16 %v145, %v144
    %vm150 = vcmask 261120
    %v152 = vsel %vm150, %v126, 0
    %154 = vmatprep.subr.bf16.mxu0 0
    %155 = vmatpush1.bf16.msra.mxu0 %v146
    %156 = vmatprep.subr.bf16.mxu0 0
    %157 = vmatpush1.bf16.msra.mxu0 %v147
    %158 = vmatprep.subr.bf16.mxu0 0
    %159 = vmatpush1.bf16.msra.mxu0 0
    %160 = vmatprep.subr.bf16.mxu0 0
    %161 = vmatpush1.bf16.msra.mxu0 0
    %162 = vmatprep.subr.bf16.mxu0 0
    %163 = vmatpush1.bf16.msra.mxu0 0
    %164 = vmatprep.subr.bf16.mxu0 0
    %165 = vmatpush1.bf16.msra.mxu0 0
    %166 = vmatprep.subr.bf16.mxu0 0
    %167 = vmatpush1.bf16.msra.mxu0 0
    %168 = vmatprep.subr.bf16.mxu0 0
    %169 = vmatpush1.bf16.msra.mxu0 0
    %170 = vmatprep.subr.bf16.mxu0 0
    %171 = vmatpush1.bf16.msra.mxu0 0
    %172 = vmatprep.subr.bf16.mxu0 0
    %173 = vmatpush1.bf16.msra.mxu0 0
    %174 = vmatprep.subr.bf16.mxu0 0
    %175 = vmatpush1.bf16.msra.mxu0 0
    %176 = vmatprep.subr.bf16.mxu0 0
    %177 = vmatpush1.bf16.msra.mxu0 0
    %178 = vmatprep.subr.bf16.mxu0 0
    %179 = vmatpush1.bf16.msra.mxu0 0
    %180 = vmatprep.subr.bf16.mxu0 0
    %181 = vmatpush1.bf16.msra.mxu0 0
    %182 = vmatprep.subr.bf16.mxu0 0
    %183 = vmatpush1.bf16.msra.mxu0 0
    %184 = vmatprep.subr.bf16.mxu0 0
    %185 = vmatpush1.bf16.msra.mxu0 0
    %186 = vmatprep.mubr.bf16.mxu0 0
    %187 = vmatmul.mubr.bf16.gmra.mrb[0].mxu0 %v152
    %v188 = vpop.f32.mrb[0].mxu0
    %v189 = vadd.f32 %v136, %v188
    %v190 = vpop.f32.mrb[0].mxu0
    %v191 = vpop.f32.mrb[0].mxu0
    %v192 = vpop.f32.mrb[0].mxu0
    %193 = vdwg.mxu0
    %v194 = vmax.f32 %v189, 0.0
    %v195 = vpack.c.bf16 %v194, %v194
    %v196 = vld [vmem:[#allocation9] sm:$0xf]
    %v197 = vld [vmem:[#allocation9 + $0x4] sm:$0xf]
    %v198 = vld [vmem:[#allocation9 + $0x8] sm:$0xf]
    %v199 = vld [vmem:[#allocation9 + $0xc] sm:$0xf]
    %v200 = vld [vmem:[#allocation9 + $0x10] sm:$0xf]
    %v201 = vld [vmem:[#allocation9 + $0x14] sm:$0xf]
    %v202 = vld [vmem:[#allocation9 + $0x18] sm:$0xf]
    %v203 = vld [vmem:[#allocation9 + $0x1c] sm:$0xf]
    %v204 = vld [vmem:[#allocation9 + $0x20] sm:$0xf]
    %v205 = vld [vmem:[#allocation9 + $0x24] sm:$0xf]
    %v206 = vld [vmem:[#allocation9 + $0x28] sm:$0xf]
    %v207 = vld [vmem:[#allocation9 + $0x2c] sm:$0xf]
    %v208 = vld [vmem:[#allocation9 + $0x30] sm:$0xf]
    %v209 = vld [vmem:[#allocation9 + $0x34] sm:$0xf]
    %v210 = vld [vmem:[#allocation9 + $0x38] sm:$0xf]
    %v211 = vld [vmem:[#allocation9 + $0x3c] sm:$0xf]
    %v212 = vld [vmem:[%s5] sm:$0x1]
    %v214 = vlaneseq
    %v215 = vshrl.u32 %v214, 7
    %v216 = vsub.s32 0, %v215
    %v217 = vrot.slane %v212, %v216
    %v235 = vunpack.c.l.b16 %v196
    %v236 = vunpack.c.l.b16 %v197
    %v237 = vunpack.c.l.b16 %v198
    %v238 = vunpack.c.l.b16 %v199
    %v239 = vunpack.c.l.b16 %v200
    %v240 = vunpack.c.l.b16 %v201
    %v241 = vunpack.c.l.b16 %v202
    %v242 = vunpack.c.l.b16 %v203
    %v243 = vunpack.c.l.b16 %v204
    %v244 = vunpack.c.l.b16 %v205
    %v245 = vunpack.c.l.b16 %v206
    %v246 = vunpack.c.l.b16 %v207
    %v247 = vunpack.c.l.b16 %v208
    %v248 = vunpack.c.l.b16 %v209
    %v249 = vunpack.c.l.b16 %v210
    %v250 = vunpack.c.l.b16 %v211
    %v251 = vpack.c.b16 %v236, %v235
    %v252 = vpack.c.b16 %v238, %v237
    %v253 = vpack.c.b16 %v240, %v239
    %v254 = vpack.c.b16 %v242, %v241
    %v255 = vpack.c.b16 %v244, %v243
    %v256 = vpack.c.b16 %v246, %v245
    %v257 = vpack.c.b16 %v248, %v247
    %v258 = vpack.c.b16 %v250, %v249
    %267 = vmatprep.subr.bf16.mxu0 0
    %268 = vmatpush1.bf16.msra.mxu0 %v251
    %269 = vmatprep.subr.bf16.mxu0 0
    %270 = vmatpush1.bf16.msra.mxu0 %v252
    %271 = vmatprep.subr.bf16.mxu0 0
    %272 = vmatpush1.bf16.msra.mxu0 %v253
    %273 = vmatprep.subr.bf16.mxu0 0
    %274 = vmatpush1.bf16.msra.mxu0 %v254
    %275 = vmatprep.subr.bf16.mxu0 0
    %276 = vmatpush1.bf16.msra.mxu0 %v255
    %277 = vmatprep.subr.bf16.mxu0 0
    %278 = vmatpush1.bf16.msra.mxu0 %v256
    %279 = vmatprep.subr.bf16.mxu0 0
    %280 = vmatpush1.bf16.msra.mxu0 %v257
    %281 = vmatprep.subr.bf16.mxu0 0
    %282 = vmatpush1.bf16.msra.mxu0 %v258
    %283 = vmatprep.subr.bf16.mxu0 0
    %284 = vmatpush1.bf16.msra.mxu0 0
    %285 = vmatprep.subr.bf16.mxu0 0
    %286 = vmatpush1.bf16.msra.mxu0 0
    %287 = vmatprep.subr.bf16.mxu0 0
    %288 = vmatpush1.bf16.msra.mxu0 0
    %289 = vmatprep.subr.bf16.mxu0 0
    %290 = vmatpush1.bf16.msra.mxu0 0
    %291 = vmatprep.subr.bf16.mxu0 0
    %292 = vmatpush1.bf16.msra.mxu0 0
    %293 = vmatprep.subr.bf16.mxu0 0
    %294 = vmatpush1.bf16.msra.mxu0 0
    %295 = vmatprep.subr.bf16.mxu0 0
    %296 = vmatpush1.bf16.msra.mxu0 0
    %297 = vmatprep.subr.bf16.mxu0 0
    %298 = vmatpush1.bf16.msra.mxu0 0
    %299 = vmatprep.mubr.bf16.mxu0 0
    %300 = vmatmul.mubr.bf16.gmra.mrb[0].mxu0 %v195
    %v301 = vpop.f32.mrb[0].mxu0
    %v302 = vadd.f32 %v217, %v301
    %v303 = vpop.f32.mrb[0].mxu0
    %v304 = vpop.f32.mrb[0].mxu0
    %v305 = vpop.f32.mrb[0].mxu0
    %306 = vdwg.mxu0
    %v307 = vmax.f32 %v302, 0.0
    %v308 = vpack.c.bf16 %v307, %v307
    %v309 = vld [vmem:[#allocation11] sm:$0xf]
    %v310 = vld [vmem:[#allocation11 + $0x4] sm:$0xf]
    %v311 = vld [vmem:[#allocation11 + $0x8] sm:$0xf]
    %v312 = vld [vmem:[#allocation11 + $0xc] sm:$0xf]
    %v313 = vld [vmem:[#allocation11 + $0x10] sm:$0xf]
    %v314 = vld [vmem:[#allocation11 + $0x14] sm:$0xf]
    %v315 = vld [vmem:[#allocation11 + $0x18] sm:$0xf]
    %v316 = vld [vmem:[#allocation11 + $0x1c] sm:$0xf]
    %v317 = vld [vmem:[#allocation11 + $0x20] sm:$0xf]
    %v318 = vld [vmem:[#allocation11 + $0x24] sm:$0xf]
    %v319 = vld [vmem:[#allocation11 + $0x28] sm:$0xf]
    %v320 = vld [vmem:[#allocation11 + $0x2c] sm:$0xf]
    %v321 = vld [vmem:[#allocation11 + $0x30] sm:$0xf]
    %v322 = vld [vmem:[#allocation11 + $0x34] sm:$0xf]
    %v323 = vld [vmem:[#allocation11 + $0x38] sm:$0xf]
    %v324 = vld [vmem:[#allocation11 + $0x3c] sm:$0xf]
    %v325 = vld [vmem:[%s7] sm:$0x1]
    %v327 = vlaneseq
    %v328 = vshrl.u32 %v327, 7
    %v329 = vsub.s32 0, %v328
    %v330 = vrot.slane %v325, %v329
    %v348 = vunpack.c.l.b16 %v309
    %v349 = vunpack.c.l.b16 %v310
    %v350 = vunpack.c.l.b16 %v311
    %v351 = vunpack.c.l.b16 %v312
    %v352 = vunpack.c.l.b16 %v313
    %v353 = vunpack.c.l.b16 %v314
    %v354 = vunpack.c.l.b16 %v315
    %v355 = vunpack.c.l.b16 %v316
    %v356 = vunpack.c.l.b16 %v317
    %v357 = vunpack.c.l.b16 %v318
    %v358 = vunpack.c.l.b16 %v319
    %v359 = vunpack.c.l.b16 %v320
    %v360 = vunpack.c.l.b16 %v321
    %v361 = vunpack.c.l.b16 %v322
    %v362 = vunpack.c.l.b16 %v323
    %v363 = vunpack.c.l.b16 %v324
    %v364 = vpack.c.b16 %v349, %v348
    %v365 = vpack.c.b16 %v351, %v350
    %v366 = vpack.c.b16 %v353, %v352
    %v367 = vpack.c.b16 %v355, %v354
    %v368 = vpack.c.b16 %v357, %v356
    %v369 = vpack.c.b16 %v359, %v358
    %v370 = vpack.c.b16 %v361, %v360
    %v371 = vpack.c.b16 %v363, %v362
    %380 = vmatprep.subr.bf16.mxu0 0
    %381 = vmatpush1.bf16.msra.mxu0 %v364
    %382 = vmatprep.subr.bf16.mxu0 0
    %383 = vmatpush1.bf16.msra.mxu0 %v365
    %384 = vmatprep.subr.bf16.mxu0 0
    %385 = vmatpush1.bf16.msra.mxu0 %v366
    %386 = vmatprep.subr.bf16.mxu0 0
    %387 = vmatpush1.bf16.msra.mxu0 %v367
    %388 = vmatprep.subr.bf16.mxu0 0
    %389 = vmatpush1.bf16.msra.mxu0 %v368
    %390 = vmatprep.subr.bf16.mxu0 0
    %391 = vmatpush1.bf16.msra.mxu0 %v369
    %392 = vmatprep.subr.bf16.mxu0 0
    %393 = vmatpush1.bf16.msra.mxu0 %v370
    %394 = vmatprep.subr.bf16.mxu0 0
    %395 = vmatpush1.bf16.msra.mxu0 %v371
    %396 = vmatprep.subr.bf16.mxu0 0
    %397 = vmatpush1.bf16.msra.mxu0 0
    %398 = vmatprep.subr.bf16.mxu0 0
    %399 = vmatpush1.bf16.msra.mxu0 0
    %400 = vmatprep.subr.bf16.mxu0 0
    %401 = vmatpush1.bf16.msra.mxu0 0
    %402 = vmatprep.subr.bf16.mxu0 0
    %403 = vmatpush1.bf16.msra.mxu0 0
    %404 = vmatprep.subr.bf16.mxu0 0
    %405 = vmatpush1.bf16.msra.mxu0 0
    %406 = vmatprep.subr.bf16.mxu0 0
    %407 = vmatpush1.bf16.msra.mxu0 0
    %408 = vmatprep.subr.bf16.mxu0 0
    %409 = vmatpush1.bf16.msra.mxu0 0
    %410 = vmatprep.subr.bf16.mxu0 0
    %411 = vmatpush1.bf16.msra.mxu0 0
    %412 = vmatprep.mubr.bf16.mxu0 0
    %413 = vmatmul.mubr.bf16.gmra.mrb[0].mxu0 %v308
    %v414 = vpop.f32.mrb[0].mxu0
    %v415 = vadd.f32 %v330, %v414
    %v416 = vpop.f32.mrb[0].mxu0
    %v417 = vpop.f32.mrb[0].mxu0
    %v418 = vpop.f32.mrb[0].mxu0
    %419 = vdwg.mxu0
    %v420 = vmax.f32 %v415, 0.0
    %v421 = vpack.c.bf16 %v420, %v420
    %v422 = vld [vmem:[#allocation12] sm:$0xf]
    %v423 = vld [vmem:[#allocation12 + $0x4] sm:$0xf]
    %v424 = vld [vmem:[#allocation12 + $0x8] sm:$0xf]
    %v425 = vld [vmem:[#allocation12 + $0xc] sm:$0xf]
    %v426 = vld [vmem:[#allocation12 + $0x10] sm:$0xf]
    %v427 = vld [vmem:[#allocation12 + $0x14] sm:$0xf]
    %v428 = vld [vmem:[#allocation12 + $0x18] sm:$0xf]
    %v429 = vld [vmem:[#allocation12 + $0x1c] sm:$0xf]
    %v430 = vld [vmem:[#allocation12 + $0x20] sm:$0xf]
    %v431 = vld [vmem:[#allocation12 + $0x24] sm:$0xf]
    %v432 = vld [vmem:[#allocation12 + $0x28] sm:$0xf]
    %v433 = vld [vmem:[#allocation12 + $0x2c] sm:$0xf]
    %v434 = vld [vmem:[#allocation12 + $0x30] sm:$0xf]
    %v435 = vld [vmem:[#allocation12 + $0x34] sm:$0xf]
    %v436 = vld [vmem:[#allocation12 + $0x38] sm:$0xf]
    %v437 = vld [vmem:[#allocation12 + $0x3c] sm:$0xf]
    %v438 = vld [vmem:[%s9] sm:$0x1]
    %v440 = vlaneseq
    %v441 = vshrl.u32 %v440, 7
    %v442 = vsub.s32 0, %v441
    %v443 = vrot.slane %v438, %v442
    %v461 = vunpack.c.l.b16 %v422
    %v462 = vunpack.c.l.b16 %v423
    %v463 = vunpack.c.l.b16 %v424
    %v464 = vunpack.c.l.b16 %v425
    %v465 = vunpack.c.l.b16 %v426
    %v466 = vunpack.c.l.b16 %v427
    %v467 = vunpack.c.l.b16 %v428
    %v468 = vunpack.c.l.b16 %v429
    %v469 = vunpack.c.l.b16 %v430
    %v470 = vunpack.c.l.b16 %v431
    %v471 = vunpack.c.l.b16 %v432
    %v472 = vunpack.c.l.b16 %v433
    %v473 = vunpack.c.l.b16 %v434
    %v474 = vunpack.c.l.b16 %v435
    %v475 = vunpack.c.l.b16 %v436
    %v476 = vunpack.c.l.b16 %v437
    %v477 = vpack.c.b16 %v462, %v461
    %v478 = vpack.c.b16 %v464, %v463
    %v479 = vpack.c.b16 %v466, %v465
    %v480 = vpack.c.b16 %v468, %v467
    %v481 = vpack.c.b16 %v470, %v469
    %v482 = vpack.c.b16 %v472, %v471
    %v483 = vpack.c.b16 %v474, %v473
    %v484 = vpack.c.b16 %v476, %v475
    %493 = vmatprep.subr.bf16.mxu0 0
    %494 = vmatpush1.bf16.msra.mxu0 %v477
    %495 = vmatprep.subr.bf16.mxu0 0
    %496 = vmatpush1.bf16.msra.mxu0 %v478
    %497 = vmatprep.subr.bf16.mxu0 0
    %498 = vmatpush1.bf16.msra.mxu0 %v479
    %499 = vmatprep.subr.bf16.mxu0 0
    %500 = vmatpush1.bf16.msra.mxu0 %v480
    %501 = vmatprep.subr.bf16.mxu0 0
    %502 = vmatpush1.bf16.msra.mxu0 %v481
    %503 = vmatprep.subr.bf16.mxu0 0
    %504 = vmatpush1.bf16.msra.mxu0 %v482
    %505 = vmatprep.subr.bf16.mxu0 0
    %506 = vmatpush1.bf16.msra.mxu0 %v483
    %507 = vmatprep.subr.bf16.mxu0 0
    %508 = vmatpush1.bf16.msra.mxu0 %v484
    %509 = vmatprep.subr.bf16.mxu0 0
    %510 = vmatpush1.bf16.msra.mxu0 0
    %511 = vmatprep.subr.bf16.mxu0 0
    %512 = vmatpush1.bf16.msra.mxu0 0
    %513 = vmatprep.subr.bf16.mxu0 0
    %514 = vmatpush1.bf16.msra.mxu0 0
    %515 = vmatprep.subr.bf16.mxu0 0
    %516 = vmatpush1.bf16.msra.mxu0 0
    %517 = vmatprep.subr.bf16.mxu0 0
    %518 = vmatpush1.bf16.msra.mxu0 0
    %519 = vmatprep.subr.bf16.mxu0 0
    %520 = vmatpush1.bf16.msra.mxu0 0
    %521 = vmatprep.subr.bf16.mxu0 0
    %522 = vmatpush1.bf16.msra.mxu0 0
    %523 = vmatprep.subr.bf16.mxu0 0
    %524 = vmatpush1.bf16.msra.mxu0 0
    %525 = vmatprep.mubr.bf16.mxu0 0
    %526 = vmatmul.mubr.bf16.gmra.mrb[0].mxu0 %v421
    %v527 = vpop.f32.mrb[0].mxu0
    %v528 = vadd.f32 %v443, %v527
    %v529 = vpop.f32.mrb[0].mxu0
    %v530 = vpop.f32.mrb[0].mxu0
    %v531 = vpop.f32.mrb[0].mxu0
    %532 = vdwg.mxu0
    %533 = vxpose.xlu0.b32.start [1/16] %v528, 128
    %534 = vxpose.xlu0.b32.cont [2/16] 0.0, 128
    %535 = vxpose.xlu0.b32.cont [3/16] 0.0, 128
    %536 = vxpose.xlu0.b32.cont [4/16] 0.0, 128
    %537 = vxpose.xlu0.b32.cont [5/16] 0.0, 128
    %538 = vxpose.xlu0.b32.cont [6/16] 0.0, 128
    %539 = vxpose.xlu0.b32.cont [7/16] 0.0, 128
    %540 = vxpose.xlu0.b32.cont [8/16] 0.0, 128
    %541 = vxpose.xlu0.b32.cont [9/16] 0.0, 128
    %542 = vxpose.xlu0.b32.cont [10/16] 0.0, 128
    %543 = vxpose.xlu0.b32.cont [11/16] 0.0, 128
    %544 = vxpose.xlu0.b32.cont [12/16] 0.0, 128
    %545 = vxpose.xlu0.b32.cont [13/16] 0.0, 128
    %546 = vxpose.xlu0.b32.cont [14/16] 0.0, 128
    %547 = vxpose.xlu0.b32.cont [15/16] 0.0, 128
    %548 = vxpose.xlu0.b32.end [16/16] 0.0, 128
    %v549 = vpop.trf.xlu0
    %v550 = vpop.trf.xlu0
    %v551 = vpop.trf.xlu0
    %v552 = vpop.trf.xlu0
    %v553 = vpop.trf.xlu0
    %v554 = vpop.trf.xlu0
    %v555 = vpop.trf.xlu0
    %v556 = vpop.trf.xlu0
    %v557 = vpop.trf.xlu0
    %v558 = vpop.trf.xlu0
    %v559 = vpop.trf.xlu0
    %v560 = vpop.trf.xlu0
    %v561 = vpop.trf.xlu0
    %v562 = vpop.trf.xlu0
    %v563 = vpop.trf.xlu0
    %v564 = vpop.trf.xlu0
    %v565 = vxor.u32 %v549, 2147483648
    %v566 = vmul.f32 %v565, 1.442695
    %v567 = vpow.pop %v566
    %v568 = vadd.f32 %v567, 1.0
    %v569 = vrcp.pop %v568
    %v570 = vmul.f32 1.0, %v569
    %v571 = vmax.f32 %v570, 0.1
    %v572 = vmin.f32 %v571, 0.9
    %vm573 = vcmask 57344
    %574 = vst.msk [vmem:[#allocation14] sm:$0x1] %vm573, %v572
    // Predicated region
    $region66: #{tpu_custom_call.1} parent=1 // pred_check
      _
    $region67: #{tpu_custom_call.1} parent=1 // pred_check_branch
      %576 = sbr.rel (0) target = $region69
    $region68: #{tpu_custom_call.1} parent=1 // pred_region
      %s578 = ssub.s32 16, 16
      %579 = vsyncadd [#allocation5], %s578
      %s581 = sshll.u32 [#allocation14], 4
      %s582 = int_to_ptr.vmem [resolvable:$true] %s581
      %584 = dma.vmem_to_hbm [thread:$0]  %s582, 16, %s10, [#allocation5]
    $region69: #{tpu_custom_call.1} parent=1 // pred_fallthru
      _
    // Predicated region
    $region70: #{tpu_custom_call.1} parent=1 // pred_check
      _
    $region71: #{tpu_custom_call.1} parent=1 // pred_check_branch
      %586 = sbr.rel (0) target = $region73
    $region72: #{tpu_custom_call.1} parent=1 // pred_region
      %587 = dma.done [#allocation5], 16
    $region73: #{tpu_custom_call.1} parent=1 // pred_fallthru
      _
    %588 = vsyncpa [#allocation4], 1
    %589 = vsyncpa [#allocation7], 1
    %590 = vsyncpa [#allocation10], 1
    %591 = vsyncpa [#allocation13], 1
    %592 = vsyncpa [#allocation5], 1

</llo_original>
